<compile_context>
chip_gen: v7x
topology: tpu7x:2x2x1
jax: 0.10.0
libtpu: 0.0.40
codegen_flags: <defaults>
</compile_context>

<pallas_src>
import math

import jax
import jax.numpy as jnp
from jax.experimental import pallas as pl
from jax.experimental.pallas import tpu as pltpu

INPUT_SIZE = 2
HIDDEN = 5
GATE_PAD = 128  # each gate gets its own lane-aligned 128-wide slot


def lstm_cell_zero_state_kernel(x_ref, w_ref, b_ref, hc_ref):
    """One LSTMCell step from zero initial state, fully in VMEM.

    x_ref  : (B, I)        input
    w_ref  : (I, 4*GP)     gate-padded W_ih^T  (gate order [i, f, g, o])
    b_ref  : (1, 4*GP)     gate-padded (b_ih + b_hh)
    hc_ref : (B, 2*GP)     output block: [h_new | c_new], each GP lanes wide
    """
    GP = GATE_PAD

    # Single MXU push; bias added on the VPU (VALU slots are idle anyway).
    gates = jnp.dot(x_ref[...], w_ref[...],
                    preferred_element_type=jnp.float32,
                    precision=jax.lax.Precision.HIGHEST) + b_ref[...]  # (B, 4*GP)

    # Lane-aligned static gate slices (offsets 0, 128, 256, 384).
    i_g = jax.nn.sigmoid(gates[:, 0 * GP:1 * GP])
    # f gate is dead: c0 == 0 so f_g * c0 == 0 -> skip the sigmoid entirely.
    g_g = jnp.tanh(gates[:, 2 * GP:3 * GP])
    o_g = jax.nn.sigmoid(gates[:, 3 * GP:4 * GP])

    c_new = i_g * g_g
    h_new = o_g * jnp.tanh(c_new)

    # Lane-dense, unmasked stores into one output block.
    hc_ref[:, 0 * GP:1 * GP] = h_new.astype(hc_ref.dtype)
    hc_ref[:, 1 * GP:2 * GP] = c_new.astype(hc_ref.dtype)


def pack_lstm_params(w_ih, w_hh, b_ih, b_hh):
    """One-time packing of PyTorch-layout LSTMCell params for the kernel.

    w_ih (4H, I), w_hh (4H, H), b_ih/b_hh (4H,) -> (I, 4*GP) weights and
    (1, 4*GP) bias, each gate's H columns padded to GP lanes.  Since the model
    always starts from zero state, W_hh contributes nothing and is dropped;
    b_hh still contributes and is folded into the bias.
    """
    H = w_hh.shape[1]
    I = w_ih.shape[1]
    GP = GATE_PAD
    w_packed = jnp.pad(jnp.transpose(w_ih).reshape(I, 4, H),
                       ((0, 0), (0, 0), (0, GP - H))).reshape(I, 4 * GP)
    b_packed = jnp.pad((b_ih + b_hh).reshape(4, H),
                       ((0, 0), (0, GP - H))).reshape(1, 4 * GP)
    return w_packed, b_packed


@jax.jit
def lstm_cell_forward(x, w_packed, b_packed):
    """Jitted forward: exactly one pallas_call; (B, 5) slices taken here."""
    B = x.shape[0]
    GP = GATE_PAD
    vmem = pl.BlockSpec(memory_space=pltpu.MemorySpace.VMEM)

    hc = pl.pallas_call(
        lstm_cell_zero_state_kernel,
        in_specs=[vmem, vmem, vmem],
        out_specs=vmem,
        out_shape=jax.ShapeDtypeStruct((B, 2 * GP), x.dtype),
    )(x, w_packed, b_packed)

    h_new = hc[:, 0 * GP:0 * GP + HIDDEN]
    c_new = hc[:, 1 * GP:1 * GP + HIDDEN]
    return h_new, c_new


def lstm_cell_ref(x, h0, c0, w_ih, w_hh, b_ih, b_hh):
    """Pure-JAX full LSTMCell reference for correctness checking."""
    gates = x @ w_ih.T + h0 @ w_hh.T + b_ih + b_hh
    H = HIDDEN
    i_g = jax.nn.sigmoid(gates[:, 0 * H:1 * H])
    f_g = jax.nn.sigmoid(gates[:, 1 * H:2 * H])
    g_g = jnp.tanh(gates[:, 2 * H:3 * H])
    o_g = jax.nn.sigmoid(gates[:, 3 * H:4 * H])
    c_new = f_g * c0 + i_g * g_g
    h_new = o_g * jnp.tanh(c_new)
    return h_new, c_new


if __name__ == "__main__":
    key = jax.random.PRNGKey(0)
    k_wih, k_whh, k_bih, k_bhh, k_x = jax.random.split(key, 5)

    # PyTorch LSTMCell init: U(-1/sqrt(H), 1/sqrt(H)) for all parameters.
    bound = 1.0 / math.sqrt(HIDDEN)
    w_ih = jax.random.uniform(k_wih, (4 * HIDDEN, INPUT_SIZE), jnp.float32,
                              -bound, bound)
    w_hh = jax.random.uniform(k_whh, (4 * HIDDEN, HIDDEN), jnp.float32,
                              -bound, bound)
    b_ih = jax.random.uniform(k_bih, (4 * HIDDEN,), jnp.float32, -bound, bound)
    b_hh = jax.random.uniform(k_bhh, (4 * HIDDEN,), jnp.float32, -bound, bound)

    # One-time parameter packing (static across forward calls).
    w_packed, b_packed = pack_lstm_params(w_ih, w_hh, b_ih, b_hh)
    w_packed, b_packed = jax.block_until_ready((w_packed, b_packed))

    # Small batch of inputs of shape (batch, input_size); initial state = 0
    # (PyTorch LSTMCell default when hx is not provided).
    B = 2
    x1 = jax.random.normal(k_x, (B, INPUT_SIZE), jnp.float32)

    v1 = lstm_cell_forward(x1, w_packed, b_packed)   # (h_1, c_1)
    v1 = jax.block_until_ready(v1)

    h0 = jnp.zeros((B, HIDDEN), jnp.float32)
    c0 = jnp.zeros((B, HIDDEN), jnp.float32)
    h_ref, c_ref = lstm_cell_ref(x1, h0, c0, w_ih, w_hh, b_ih, b_hh)
    assert jnp.allclose(v1[0], h_ref, atol=1e-5, rtol=1e-5)
    assert jnp.allclose(v1[1], c_ref, atol=1e-5, rtol=1e-5)

    print("KERNEL_OK")
</pallas_src>

<mosaic_0001>
module attributes {stable_mosaic.version = 11 : i64} {
  func.func @lstm_cell_zero_state_kernel(%arg0: memref<2x2xf32, #tpu.memory_space<vmem>>, %arg1: memref<2x512xf32, #tpu.memory_space<vmem>>, %arg2: memref<1x512xf32, #tpu.memory_space<vmem>>, %arg3: memref<2x256xf32, #tpu.memory_space<vmem>>) attributes {dimension_semantics = [], scalar_prefetch = 0 : i64, scratch_operands = 0 : i64, tpu.core_type = #tpu.core_type<tc>} {
    %c0 = arith.constant 0 : index
    %c0_0 = arith.constant 0 : index
    %0 = vector.load %arg0[%c0, %c0_0] : memref<2x2xf32, #tpu.memory_space<vmem>>, vector<2x2xf32>
    %c0_1 = arith.constant 0 : index
    %c0_2 = arith.constant 0 : index
    %1 = vector.load %arg1[%c0_1, %c0_2] : memref<2x512xf32, #tpu.memory_space<vmem>>, vector<2x512xf32>
    %cst = arith.constant dense<0.000000e+00> : vector<2x512xf32>
    %2 = tpu.matmul %0, %1, %cst {dimension_numbers = #tpu.dot_dimension_numbers<[1], [0], [0], [1], [0, 0, 1, 1], [], []>, precision = #tpu.contract_precision<fp32>} : vector<2x2xf32>, vector<2x512xf32>, vector<2x512xf32> -> vector<2x512xf32>
    %c0_3 = arith.constant 0 : index
    %c0_4 = arith.constant 0 : index
    %3 = vector.load %arg2[%c0_3, %c0_4] : memref<1x512xf32, #tpu.memory_space<vmem>>, vector<1x512xf32>
    %4 = vector.broadcast %3 : vector<1x512xf32> to vector<2x512xf32>
    %5 = arith.addf %2, %4 : vector<2x512xf32>
    %6 = vector.extract_strided_slice %5 {offsets = [0, 0], sizes = [2, 128], strides = [1, 1]} : vector<2x512xf32> to vector<2x128xf32>
    %7 = arith.negf %6 : vector<2x128xf32>
    %8 = math.exp %7 : vector<2x128xf32>
    %cst_5 = arith.constant 1.000000e+00 : f32
    %9 = vector.broadcast %cst_5 : f32 to vector<2x128xf32>
    %10 = arith.addf %9, %8 : vector<2x128xf32>
    %11 = arith.divf %9, %10 : vector<2x128xf32>
    %12 = vector.extract_strided_slice %5 {offsets = [0, 256], sizes = [2, 128], strides = [1, 1]} : vector<2x512xf32> to vector<2x128xf32>
    %13 = math.tanh %12 : vector<2x128xf32>
    %14 = vector.extract_strided_slice %5 {offsets = [0, 384], sizes = [2, 128], strides = [1, 1]} : vector<2x512xf32> to vector<2x128xf32>
    %15 = arith.negf %14 : vector<2x128xf32>
    %16 = math.exp %15 : vector<2x128xf32>
    %cst_6 = arith.constant 1.000000e+00 : f32
    %17 = vector.broadcast %cst_6 : f32 to vector<2x128xf32>
    %18 = arith.addf %17, %16 : vector<2x128xf32>
    %19 = arith.divf %17, %18 : vector<2x128xf32>
    %20 = arith.mulf %11, %13 : vector<2x128xf32>
    %21 = math.tanh %20 : vector<2x128xf32>
    %22 = arith.mulf %19, %21 : vector<2x128xf32>
    %c0_7 = arith.constant 0 : index
    %c0_8 = arith.constant 0 : index
    %23 = vector.load %arg3[%c0_7, %c0_8] : memref<2x256xf32, #tpu.memory_space<vmem>>, vector<2x128xf32>
    tpu.vector_store %arg3[%c0_7, %c0_8], %22 {strides = array<i32>} : memref<2x256xf32, #tpu.memory_space<vmem>>, vector<2x128xf32>,
    %c0_9 = arith.constant 0 : index
    %c128 = arith.constant 128 : index
    %24 = vector.load %arg3[%c0_9, %c128] : memref<2x256xf32, #tpu.memory_space<vmem>>, vector<2x128xf32>
    tpu.vector_store %arg3[%c0_9, %c128], %20 {strides = array<i32>} : memref<2x256xf32, #tpu.memory_space<vmem>>, vector<2x128xf32>,
    return
  }
}

</mosaic_0001>

<llo_original>
// kernel: lstm_cell_forward.1
$region0: #{lstm_cell_forward.1}
  #allocation0 [shape = 'u32[]', space=smem, size = 0x4, offset = 0x4, fixed_abs, tag = 'smem constant byte address 0x4 - core index']
  #allocation1 [shape = 'u32[144,128]{1,0:T(1,128)}', space=vmem, size = 0x12000, scoped, tag = 'internal scratch']
  %s0 = inlined_call_operand.hbm [shape: f32[2,2], index: 0, kind: input, shape index: {}]
  %s1 = inlined_call_operand.hbm [shape: f32[2,512], index: 1, kind: input, shape index: {}]
  %s2 = inlined_call_operand.vmem [shape: f32[1,512], index: 2, kind: input, shape index: {}]
  %s3 = inlined_call_operand.vmem [shape: f32[2,256], index: 3, kind: output, shape index: {}]
  %s4 = sld [smem:[#allocation0]]
  $region30: #{lstm_cell_forward.1} parent=0
    _
  %s6 = ssub.s32 1, %s4
  %s7 = scalar_select 0, %s6, %s4
  $region1: #{lstm_cell_forward.1} parent=0
    #allocation2 [shape = 'u8[1024]{0}', space=vmem, size = 0x400, scoped, tag = 'input window, operand 0, single buffered']
    #allocation3 [shape = 's32[1]{0}', space=sflag, size = 0x4, scoped, tag = 'scoped memory for lstm_cell_forward.1']
    #allocation4 [shape = 'u8[4096]{0}', space=vmem, size = 0x1000, scoped, tag = 'input window, operand 1, single buffered']
    #allocation5 [shape = 's32[1]{0}', space=sflag, size = 0x4, scoped, tag = 'scoped memory for lstm_cell_forward.1']
    %8 = vsyncpa [#allocation3], 0
    %9 = vsyncpa [#allocation5], 0
    // Predicated region
    $region2: #{lstm_cell_forward.1} parent=1 // pred_check
      _
    $region3: #{lstm_cell_forward.1} parent=1 // pred_check_branch
      %11 = sbr.rel (0) target = $region5
    $region4: #{lstm_cell_forward.1} parent=1 // pred_region
      %s13 = ssub.s32 32, 32
      %14 = vsyncadd [#allocation3], %s13
      %s16 = sshll.u32 [#allocation2], 4
      %s17 = int_to_ptr.vmem [resolvable:$true] %s16
      %19 = dma.hbm_to_vmem [thread:$0]  %s0, 32, %s17, [#allocation3]
    $region5: #{lstm_cell_forward.1} parent=1 // pred_fallthru
      _
    // Predicated region
    $region6: #{lstm_cell_forward.1} parent=1 // pred_check
      _
    $region7: #{lstm_cell_forward.1} parent=1 // pred_check_branch
      %21 = sbr.rel (0) target = $region9
    $region8: #{lstm_cell_forward.1} parent=1 // pred_region
      %s23 = ssub.s32 128, 128
      %24 = vsyncadd [#allocation5], %s23
      %s26 = sshll.u32 [#allocation4], 4
      %s27 = int_to_ptr.vmem [resolvable:$true] %s26
      %29 = dma.hbm_to_vmem [thread:$0]  %s1, 128, %s27, [#allocation5]
    $region9: #{lstm_cell_forward.1} parent=1 // pred_fallthru
      _
    // Predicated region
    $region10: #{lstm_cell_forward.1} parent=1 // pred_check
      _
    $region11: #{lstm_cell_forward.1} parent=1 // pred_check_branch
      %31 = sbr.rel (0) target = $region13
    $region12: #{lstm_cell_forward.1} parent=1 // pred_region
      _
    $region13: #{lstm_cell_forward.1} parent=1 // pred_fallthru
      _
    // Predicated region
    $region14: #{lstm_cell_forward.1} parent=1 // pred_check
      _
    $region15: #{lstm_cell_forward.1} parent=1 // pred_check_branch
      %33 = sbr.rel (0) target = $region17
    $region16: #{lstm_cell_forward.1} parent=1 // pred_region
      %34 = dma.done [#allocation3], 32
    $region17: #{lstm_cell_forward.1} parent=1 // pred_fallthru
      _
    // Predicated region
    $region18: #{lstm_cell_forward.1} parent=1 // pred_check
      _
    $region19: #{lstm_cell_forward.1} parent=1 // pred_check_branch
      %36 = sbr.rel (0) target = $region21
    $region20: #{lstm_cell_forward.1} parent=1 // pred_region
      %37 = dma.done [#allocation5], 128
    $region21: #{lstm_cell_forward.1} parent=1 // pred_fallthru
      _
    %v38 = vld [vmem:[#allocation2] sm:$0x3]
    %v39 = vld [vmem:[#allocation4] sm:$0xff]
    %v40 = vld [vmem:[%s2] sm:$0xf]
    %v42 = vlaneseq
    %v43 = vshrl.u32 %v42, 7
    %v44 = vsub.s32 0, %v43
    %v45 = vrot.slane %v40, %v44
    %v46 = vlaneseq
    %v47 = vshrl.u32 %v46, 7
    %v48 = vsub.s32 2, %v47
    %v49 = vrot.slane %v40, %v48
    %v50 = vlaneseq
    %v51 = vshrl.u32 %v50, 7
    %v52 = vsub.s32 3, %v51
    %v53 = vrot.slane %v40, %v52
    %v58 = vcombine.high %v39, %v39
    %v60 = vunpack.c.l.s4 1983009808
    %v61 = vunpack.c.0.s8 %v60
    %v62 = vlaneseq
    %v63 = vshrl.u32 %v62, 7
    %v64 = vsub.s32 %v61, %v63
    %v65 = vrot.slane %v39, %v64
    %v67 = vunpack.c.l.s4 1983009808
    %v68 = vunpack.c.0.s8 %v67
    %v69 = vlaneseq
    %v70 = vshrl.u32 %v69, 7
    %v71 = vsub.s32 %v68, %v70
    %v72 = vrot.slane %v58, %v71
    %v73 = vcombine.high %v65, %v65
    %v74 = vcombine.high %v72, %v72
    %vm75 = vcmask 15360
    %v77 = vsel %vm75, %v38, 0
    %vm79 = vcmask 1041408
    %v80 = vsel %vm79, %v65, 0
    %v82 = vsel %vm79, %v73, 0
    %v84 = vsel %vm79, %v72, 0
    %v86 = vsel %vm79, %v74, 0
    %v88 = vand.u32 %v82, 4294901760
    %89 = vmatprep.subr.mxu0 %v88
    %v90 = vand.u32 %v80, 4294901760
    %91 = vmatpush1.msra.mxu0 %v90
    %92 = vmatprep.subr.mxu0 0.0
    %93 = vmatpush1.msra.mxu0 0.0
    %94 = vmatprep.subr.mxu0 0.0
    %95 = vmatpush1.msra.mxu0 0.0
    %96 = vmatprep.subr.mxu0 0.0
    %97 = vmatpush1.msra.mxu0 0.0
    %98 = vmatprep.subr.mxu0 0.0
    %99 = vmatpush1.msra.mxu0 0.0
    %100 = vmatprep.subr.mxu0 0.0
    %101 = vmatpush1.msra.mxu0 0.0
    %102 = vmatprep.subr.mxu0 0.0
    %103 = vmatpush1.msra.mxu0 0.0
    %104 = vmatprep.subr.mxu0 0.0
    %105 = vmatpush1.msra.mxu0 0.0
    %106 = vmatprep.subr.mxu0 0.0
    %107 = vmatpush1.msra.mxu0 0.0
    %108 = vmatprep.subr.mxu0 0.0
    %109 = vmatpush1.msra.mxu0 0.0
    %110 = vmatprep.subr.mxu0 0.0
    %111 = vmatpush1.msra.mxu0 0.0
    %112 = vmatprep.subr.mxu0 0.0
    %113 = vmatpush1.msra.mxu0 0.0
    %114 = vmatprep.subr.mxu0 0.0
    %115 = vmatpush1.msra.mxu0 0.0
    %116 = vmatprep.subr.mxu0 0.0
    %117 = vmatpush1.msra.mxu0 0.0
    %118 = vmatprep.subr.mxu0 0.0
    %119 = vmatpush1.msra.mxu0 0.0
    %120 = vmatprep.subr.mxu0 0.0
    %121 = vmatpush1.msra.mxu0 0.0
    %122 = vmatprep.subr.mxu0 0.0
    %123 = vmatpush1.msra.mxu0 0.0
    %124 = vmatprep.subr.mxu0 0.0
    %125 = vmatpush1.msra.mxu0 0.0
    %126 = vmatprep.subr.mxu0 0.0
    %127 = vmatpush1.msra.mxu0 0.0
    %128 = vmatprep.subr.mxu0 0.0
    %129 = vmatpush1.msra.mxu0 0.0
    %130 = vmatprep.subr.mxu0 0.0
    %131 = vmatpush1.msra.mxu0 0.0
    %132 = vmatprep.subr.mxu0 0.0
    %133 = vmatpush1.msra.mxu0 0.0
    %134 = vmatprep.subr.mxu0 0.0
    %135 = vmatpush1.msra.mxu0 0.0
    %136 = vmatprep.subr.mxu0 0.0
    %137 = vmatpush1.msra.mxu0 0.0
    %138 = vmatprep.subr.mxu0 0.0
    %139 = vmatpush1.msra.mxu0 0.0
    %140 = vmatprep.subr.mxu0 0.0
    %141 = vmatpush1.msra.mxu0 0.0
    %142 = vmatprep.subr.mxu0 0.0
    %143 = vmatpush1.msra.mxu0 0.0
    %144 = vmatprep.subr.mxu0 0.0
    %145 = vmatpush1.msra.mxu0 0.0
    %146 = vmatprep.subr.mxu0 0.0
    %147 = vmatpush1.msra.mxu0 0.0
    %148 = vmatprep.subr.mxu0 0.0
    %149 = vmatpush1.msra.mxu0 0.0
    %150 = vmatprep.subr.mxu0 0.0
    %151 = vmatpush1.msra.mxu0 0.0
    %152 = vmatprep.subr.mxu0 0.0
    %153 = vmatpush1.msra.mxu0 0.0
    %154 = vmatprep.mubr.f32.mxu0 0.0
    %v155 = vand.u32 %v77, 4294901760
    %v156 = vsub.f32 %v77, %v155
    %v157 = vand.u32 %v156, 4294901760
    %v158 = vsub.f32 %v156, %v157
    %v159 = vand.u32 %v158, 4294901760
    %160 = vmatmul.mubr.f32.gmra.mrb[0].mxu0 %v159
    %v161 = vpop.f32.mrb[0].mxu0
    %v162 = vadd.f32 %v45, %v161
    %v163 = vpop.f32.mrb[0].mxu0
    %164 = vdwg.mxu0
    %v165 = vand.u32 %v82, 4294901760
    %v166 = vsub.f32 %v82, %v165
    %v167 = vand.u32 %v166, 4294901760
    %v168 = vsub.f32 %v166, %v167
    %v169 = vand.u32 %v168, 4294901760
    %170 = vmatprep.subr.mxu0 %v169
    %v171 = vand.u32 %v80, 4294901760
    %v172 = vsub.f32 %v80, %v171
    %v173 = vand.u32 %v172, 4294901760
    %v174 = vsub.f32 %v172, %v173
    %v175 = vand.u32 %v174, 4294901760
    %176 = vmatpush1.msra.mxu0 %v175
    %177 = vmatprep.subr.mxu0 0.0
    %178 = vmatpush1.msra.mxu0 0.0
    %179 = vmatprep.subr.mxu0 0.0
    %180 = vmatpush1.msra.mxu0 0.0
    %181 = vmatprep.subr.mxu0 0.0
    %182 = vmatpush1.msra.mxu0 0.0
    %183 = vmatprep.subr.mxu0 0.0
    %184 = vmatpush1.msra.mxu0 0.0
    %185 = vmatprep.subr.mxu0 0.0
    %186 = vmatpush1.msra.mxu0 0.0
    %187 = vmatprep.subr.mxu0 0.0
    %188 = vmatpush1.msra.mxu0 0.0
    %189 = vmatprep.subr.mxu0 0.0
    %190 = vmatpush1.msra.mxu0 0.0
    %191 = vmatprep.subr.mxu0 0.0
    %192 = vmatpush1.msra.mxu0 0.0
    %193 = vmatprep.subr.mxu0 0.0
    %194 = vmatpush1.msra.mxu0 0.0
    %195 = vmatprep.subr.mxu0 0.0
    %196 = vmatpush1.msra.mxu0 0.0
    %197 = vmatprep.subr.mxu0 0.0
    %198 = vmatpush1.msra.mxu0 0.0
    %199 = vmatprep.subr.mxu0 0.0
    %200 = vmatpush1.msra.mxu0 0.0
    %201 = vmatprep.subr.mxu0 0.0
    %202 = vmatpush1.msra.mxu0 0.0
    %203 = vmatprep.subr.mxu0 0.0
    %204 = vmatpush1.msra.mxu0 0.0
    %205 = vmatprep.subr.mxu0 0.0
    %206 = vmatpush1.msra.mxu0 0.0
    %207 = vmatprep.subr.mxu0 0.0
    %208 = vmatpush1.msra.mxu0 0.0
    %209 = vmatprep.subr.mxu0 0.0
    %210 = vmatpush1.msra.mxu0 0.0
    %211 = vmatprep.subr.mxu0 0.0
    %212 = vmatpush1.msra.mxu0 0.0
    %213 = vmatprep.subr.mxu0 0.0
    %214 = vmatpush1.msra.mxu0 0.0
    %215 = vmatprep.subr.mxu0 0.0
    %216 = vmatpush1.msra.mxu0 0.0
    %217 = vmatprep.subr.mxu0 0.0
    %218 = vmatpush1.msra.mxu0 0.0
    %219 = vmatprep.subr.mxu0 0.0
    %220 = vmatpush1.msra.mxu0 0.0
    %221 = vmatprep.subr.mxu0 0.0
    %222 = vmatpush1.msra.mxu0 0.0
    %223 = vmatprep.subr.mxu0 0.0
    %224 = vmatpush1.msra.mxu0 0.0
    %225 = vmatprep.subr.mxu0 0.0
    %226 = vmatpush1.msra.mxu0 0.0
    %227 = vmatprep.subr.mxu0 0.0
    %228 = vmatpush1.msra.mxu0 0.0
    %229 = vmatprep.subr.mxu0 0.0
    %230 = vmatpush1.msra.mxu0 0.0
    %231 = vmatprep.subr.mxu0 0.0
    %232 = vmatpush1.msra.mxu0 0.0
    %233 = vmatprep.subr.mxu0 0.0
    %234 = vmatpush1.msra.mxu0 0.0
    %235 = vmatprep.subr.mxu0 0.0
    %236 = vmatpush1.msra.mxu0 0.0
    %237 = vmatprep.subr.mxu0 0.0
    %238 = vmatpush1.msra.mxu0 0.0
    %239 = vmatprep.mubr.f32.mxu0 0.0
    %v240 = vand.u32 %v77, 4294901760
    %241 = vmatmul.mubr.f32.gmra.mrb[0].mxu0 %v240
    %v242 = vpop.f32.mrb[0].mxu0
    %v243 = vadd.f32 %v162, %v242
    %v244 = vpop.f32.mrb[0].mxu0
    %245 = vdwg.mxu0
    %v246 = vand.u32 %v82, 4294901760
    %v247 = vsub.f32 %v82, %v246
    %248 = vmatprep.subr.mxu0 %v247
    %v249 = vand.u32 %v80, 4294901760
    %v250 = vsub.f32 %v80, %v249
    %251 = vmatpush1.msra.mxu0 %v250
    %252 = vmatprep.subr.mxu0 0.0
    %253 = vmatpush1.msra.mxu0 0.0
    %254 = vmatprep.subr.mxu0 0.0
    %255 = vmatpush1.msra.mxu0 0.0
    %256 = vmatprep.subr.mxu0 0.0
    %257 = vmatpush1.msra.mxu0 0.0
    %258 = vmatprep.subr.mxu0 0.0
    %259 = vmatpush1.msra.mxu0 0.0
    %260 = vmatprep.subr.mxu0 0.0
    %261 = vmatpush1.msra.mxu0 0.0
    %262 = vmatprep.subr.mxu0 0.0
    %263 = vmatpush1.msra.mxu0 0.0
    %264 = vmatprep.subr.mxu0 0.0
    %265 = vmatpush1.msra.mxu0 0.0
    %266 = vmatprep.subr.mxu0 0.0
    %267 = vmatpush1.msra.mxu0 0.0
    %268 = vmatprep.subr.mxu0 0.0
    %269 = vmatpush1.msra.mxu0 0.0
    %270 = vmatprep.subr.mxu0 0.0
    %271 = vmatpush1.msra.mxu0 0.0
    %272 = vmatprep.subr.mxu0 0.0
    %273 = vmatpush1.msra.mxu0 0.0
    %274 = vmatprep.subr.mxu0 0.0
    %275 = vmatpush1.msra.mxu0 0.0
    %276 = vmatprep.subr.mxu0 0.0
    %277 = vmatpush1.msra.mxu0 0.0
    %278 = vmatprep.subr.mxu0 0.0
    %279 = vmatpush1.msra.mxu0 0.0
    %280 = vmatprep.subr.mxu0 0.0
    %281 = vmatpush1.msra.mxu0 0.0
    %282 = vmatprep.subr.mxu0 0.0
    %283 = vmatpush1.msra.mxu0 0.0
    %284 = vmatprep.subr.mxu0 0.0
    %285 = vmatpush1.msra.mxu0 0.0
    %286 = vmatprep.subr.mxu0 0.0
    %287 = vmatpush1.msra.mxu0 0.0
    %288 = vmatprep.subr.mxu0 0.0
    %289 = vmatpush1.msra.mxu0 0.0
    %290 = vmatprep.subr.mxu0 0.0
    %291 = vmatpush1.msra.mxu0 0.0
    %292 = vmatprep.subr.mxu0 0.0
    %293 = vmatpush1.msra.mxu0 0.0
    %294 = vmatprep.subr.mxu0 0.0
    %295 = vmatpush1.msra.mxu0 0.0
    %296 = vmatprep.subr.mxu0 0.0
    %297 = vmatpush1.msra.mxu0 0.0
    %298 = vmatprep.subr.mxu0 0.0
    %299 = vmatpush1.msra.mxu0 0.0
    %300 = vmatprep.subr.mxu0 0.0
    %301 = vmatpush1.msra.mxu0 0.0
    %302 = vmatprep.subr.mxu0 0.0
    %303 = vmatpush1.msra.mxu0 0.0
    %304 = vmatprep.subr.mxu0 0.0
    %305 = vmatpush1.msra.mxu0 0.0
    %306 = vmatprep.subr.mxu0 0.0
    %307 = vmatpush1.msra.mxu0 0.0
    %308 = vmatprep.subr.mxu0 0.0
    %309 = vmatpush1.msra.mxu0 0.0
    %310 = vmatprep.subr.mxu0 0.0
    %311 = vmatpush1.msra.mxu0 0.0
    %312 = vmatprep.subr.mxu0 0.0
    %313 = vmatpush1.msra.mxu0 0.0
    %314 = vmatprep.mubr.f32.mxu0 0.0
    %v315 = vand.u32 %v77, 4294901760
    %v316 = vsub.f32 %v77, %v315
    %317 = vmatmul.mubr.f32.gmra.mrb[0].mxu0 %v316
    %v318 = vpop.f32.mrb[0].mxu0
    %v319 = vadd.f32 %v243, %v318
    %v320 = vpop.f32.mrb[0].mxu0
    %321 = vdwg.mxu0
    %v322 = vand.u32 %v82, 4294901760
    %323 = vmatprep.subr.mxu0 %v322
    %v324 = vand.u32 %v80, 4294901760
    %325 = vmatpush1.msra.mxu0 %v324
    %326 = vmatprep.subr.mxu0 0.0
    %327 = vmatpush1.msra.mxu0 0.0
    %328 = vmatprep.subr.mxu0 0.0
    %329 = vmatpush1.msra.mxu0 0.0
    %330 = vmatprep.subr.mxu0 0.0
    %331 = vmatpush1.msra.mxu0 0.0
    %332 = vmatprep.subr.mxu0 0.0
    %333 = vmatpush1.msra.mxu0 0.0
    %334 = vmatprep.subr.mxu0 0.0
    %335 = vmatpush1.msra.mxu0 0.0
    %336 = vmatprep.subr.mxu0 0.0
    %337 = vmatpush1.msra.mxu0 0.0
    %338 = vmatprep.subr.mxu0 0.0
    %339 = vmatpush1.msra.mxu0 0.0
    %340 = vmatprep.subr.mxu0 0.0
    %341 = vmatpush1.msra.mxu0 0.0
    %342 = vmatprep.subr.mxu0 0.0
    %343 = vmatpush1.msra.mxu0 0.0
    %344 = vmatprep.subr.mxu0 0.0
    %345 = vmatpush1.msra.mxu0 0.0
    %346 = vmatprep.subr.mxu0 0.0
    %347 = vmatpush1.msra.mxu0 0.0
    %348 = vmatprep.subr.mxu0 0.0
    %349 = vmatpush1.msra.mxu0 0.0
    %350 = vmatprep.subr.mxu0 0.0
    %351 = vmatpush1.msra.mxu0 0.0
    %352 = vmatprep.subr.mxu0 0.0
    %353 = vmatpush1.msra.mxu0 0.0
    %354 = vmatprep.subr.mxu0 0.0
    %355 = vmatpush1.msra.mxu0 0.0
    %356 = vmatprep.subr.mxu0 0.0
    %357 = vmatpush1.msra.mxu0 0.0
    %358 = vmatprep.subr.mxu0 0.0
    %359 = vmatpush1.msra.mxu0 0.0
    %360 = vmatprep.subr.mxu0 0.0
    %361 = vmatpush1.msra.mxu0 0.0
    %362 = vmatprep.subr.mxu0 0.0
    %363 = vmatpush1.msra.mxu0 0.0
    %364 = vmatprep.subr.mxu0 0.0
    %365 = vmatpush1.msra.mxu0 0.0
    %366 = vmatprep.subr.mxu0 0.0
    %367 = vmatpush1.msra.mxu0 0.0
    %368 = vmatprep.subr.mxu0 0.0
    %369 = vmatpush1.msra.mxu0 0.0
    %370 = vmatprep.subr.mxu0 0.0
    %371 = vmatpush1.msra.mxu0 0.0
    %372 = vmatprep.subr.mxu0 0.0
    %373 = vmatpush1.msra.mxu0 0.0
    %374 = vmatprep.subr.mxu0 0.0
    %375 = vmatpush1.msra.mxu0 0.0
    %376 = vmatprep.subr.mxu0 0.0
    %377 = vmatpush1.msra.mxu0 0.0
    %378 = vmatprep.subr.mxu0 0.0
    %379 = vmatpush1.msra.mxu0 0.0
    %380 = vmatprep.subr.mxu0 0.0
    %381 = vmatpush1.msra.mxu0 0.0
    %382 = vmatprep.subr.mxu0 0.0
    %383 = vmatpush1.msra.mxu0 0.0
    %384 = vmatprep.subr.mxu0 0.0
    %385 = vmatpush1.msra.mxu0 0.0
    %386 = vmatprep.subr.mxu0 0.0
    %387 = vmatpush1.msra.mxu0 0.0
    %388 = vmatprep.mubr.f32.mxu0 0.0
    %v389 = vand.u32 %v77, 4294901760
    %v390 = vsub.f32 %v77, %v389
    %v391 = vand.u32 %v390, 4294901760
    %392 = vmatmul.mubr.f32.gmra.mrb[0].mxu0 %v391
    %v393 = vpop.f32.mrb[0].mxu0
    %v394 = vadd.f32 %v319, %v393
    %v395 = vpop.f32.mrb[0].mxu0
    %396 = vdwg.mxu0
    %v397 = vand.u32 %v82, 4294901760
    %v398 = vsub.f32 %v82, %v397
    %v399 = vand.u32 %v398, 4294901760
    %400 = vmatprep.subr.mxu0 %v399
    %v401 = vand.u32 %v80, 4294901760
    %v402 = vsub.f32 %v80, %v401
    %v403 = vand.u32 %v402, 4294901760
    %404 = vmatpush1.msra.mxu0 %v403
    %405 = vmatprep.subr.mxu0 0.0
    %406 = vmatpush1.msra.mxu0 0.0
    %407 = vmatprep.subr.mxu0 0.0
    %408 = vmatpush1.msra.mxu0 0.0
    %409 = vmatprep.subr.mxu0 0.0
    %410 = vmatpush1.msra.mxu0 0.0
    %411 = vmatprep.subr.mxu0 0.0
    %412 = vmatpush1.msra.mxu0 0.0
    %413 = vmatprep.subr.mxu0 0.0
    %414 = vmatpush1.msra.mxu0 0.0
    %415 = vmatprep.subr.mxu0 0.0
    %416 = vmatpush1.msra.mxu0 0.0
    %417 = vmatprep.subr.mxu0 0.0
    %418 = vmatpush1.msra.mxu0 0.0
    %419 = vmatprep.subr.mxu0 0.0
    %420 = vmatpush1.msra.mxu0 0.0
    %421 = vmatprep.subr.mxu0 0.0
    %422 = vmatpush1.msra.mxu0 0.0
    %423 = vmatprep.subr.mxu0 0.0
    %424 = vmatpush1.msra.mxu0 0.0
    %425 = vmatprep.subr.mxu0 0.0
    %426 = vmatpush1.msra.mxu0 0.0
    %427 = vmatprep.subr.mxu0 0.0
    %428 = vmatpush1.msra.mxu0 0.0
    %429 = vmatprep.subr.mxu0 0.0
    %430 = vmatpush1.msra.mxu0 0.0
    %431 = vmatprep.subr.mxu0 0.0
    %432 = vmatpush1.msra.mxu0 0.0
    %433 = vmatprep.subr.mxu0 0.0
    %434 = vmatpush1.msra.mxu0 0.0
    %435 = vmatprep.subr.mxu0 0.0
    %436 = vmatpush1.msra.mxu0 0.0
    %437 = vmatprep.subr.mxu0 0.0
    %438 = vmatpush1.msra.mxu0 0.0
    %439 = vmatprep.subr.mxu0 0.0
    %440 = vmatpush1.msra.mxu0 0.0
    %441 = vmatprep.subr.mxu0 0.0
    %442 = vmatpush1.msra.mxu0 0.0
    %443 = vmatprep.subr.mxu0 0.0
    %444 = vmatpush1.msra.mxu0 0.0
    %445 = vmatprep.subr.mxu0 0.0
    %446 = vmatpush1.msra.mxu0 0.0
    %447 = vmatprep.subr.mxu0 0.0
    %448 = vmatpush1.msra.mxu0 0.0
    %449 = vmatprep.subr.mxu0 0.0
    %450 = vmatpush1.msra.mxu0 0.0
    %451 = vmatprep.subr.mxu0 0.0
    %452 = vmatpush1.msra.mxu0 0.0
    %453 = vmatprep.subr.mxu0 0.0
    %454 = vmatpush1.msra.mxu0 0.0
    %455 = vmatprep.subr.mxu0 0.0
    %456 = vmatpush1.msra.mxu0 0.0
    %457 = vmatprep.subr.mxu0 0.0
    %458 = vmatpush1.msra.mxu0 0.0
    %459 = vmatprep.subr.mxu0 0.0
    %460 = vmatpush1.msra.mxu0 0.0
    %461 = vmatprep.subr.mxu0 0.0
    %462 = vmatpush1.msra.mxu0 0.0
    %463 = vmatprep.subr.mxu0 0.0
    %464 = vmatpush1.msra.mxu0 0.0
    %465 = vmatprep.subr.mxu0 0.0
    %466 = vmatpush1.msra.mxu0 0.0
    %467 = vmatprep.mubr.f32.mxu0 0.0
    %v468 = vand.u32 %v77, 4294901760
    %469 = vmatmul.mubr.f32.gmra.mrb[0].mxu0 %v468
    %v470 = vpop.f32.mrb[0].mxu0
    %v471 = vadd.f32 %v394, %v470
    %v472 = vpop.f32.mrb[0].mxu0
    %473 = vdwg.mxu0
    %v474 = vand.u32 %v82, 4294901760
    %475 = vmatprep.subr.mxu0 %v474
    %v476 = vand.u32 %v80, 4294901760
    %477 = vmatpush1.msra.mxu0 %v476
    %478 = vmatprep.subr.mxu0 0.0
    %479 = vmatpush1.msra.mxu0 0.0
    %480 = vmatprep.subr.mxu0 0.0
    %481 = vmatpush1.msra.mxu0 0.0
    %482 = vmatprep.subr.mxu0 0.0
    %483 = vmatpush1.msra.mxu0 0.0
    %484 = vmatprep.subr.mxu0 0.0
    %485 = vmatpush1.msra.mxu0 0.0
    %486 = vmatprep.subr.mxu0 0.0
    %487 = vmatpush1.msra.mxu0 0.0
    %488 = vmatprep.subr.mxu0 0.0
    %489 = vmatpush1.msra.mxu0 0.0
    %490 = vmatprep.subr.mxu0 0.0
    %491 = vmatpush1.msra.mxu0 0.0
    %492 = vmatprep.subr.mxu0 0.0
    %493 = vmatpush1.msra.mxu0 0.0
    %494 = vmatprep.subr.mxu0 0.0
    %495 = vmatpush1.msra.mxu0 0.0
    %496 = vmatprep.subr.mxu0 0.0
    %497 = vmatpush1.msra.mxu0 0.0
    %498 = vmatprep.subr.mxu0 0.0
    %499 = vmatpush1.msra.mxu0 0.0
    %500 = vmatprep.subr.mxu0 0.0
    %501 = vmatpush1.msra.mxu0 0.0
    %502 = vmatprep.subr.mxu0 0.0
    %503 = vmatpush1.msra.mxu0 0.0
    %504 = vmatprep.subr.mxu0 0.0
    %505 = vmatpush1.msra.mxu0 0.0
    %506 = vmatprep.subr.mxu0 0.0
    %507 = vmatpush1.msra.mxu0 0.0
    %508 = vmatprep.subr.mxu0 0.0
    %509 = vmatpush1.msra.mxu0 0.0
    %510 = vmatprep.subr.mxu0 0.0
    %511 = vmatpush1.msra.mxu0 0.0
    %512 = vmatprep.subr.mxu0 0.0
    %513 = vmatpush1.msra.mxu0 0.0
    %514 = vmatprep.subr.mxu0 0.0
    %515 = vmatpush1.msra.mxu0 0.0
    %516 = vmatprep.subr.mxu0 0.0
    %517 = vmatpush1.msra.mxu0 0.0
    %518 = vmatprep.subr.mxu0 0.0
    %519 = vmatpush1.msra.mxu0 0.0
    %520 = vmatprep.subr.mxu0 0.0
    %521 = vmatpush1.msra.mxu0 0.0
    %522 = vmatprep.subr.mxu0 0.0
    %523 = vmatpush1.msra.mxu0 0.0
    %524 = vmatprep.subr.mxu0 0.0
    %525 = vmatpush1.msra.mxu0 0.0
    %526 = vmatprep.subr.mxu0 0.0
    %527 = vmatpush1.msra.mxu0 0.0
    %528 = vmatprep.subr.mxu0 0.0
    %529 = vmatpush1.msra.mxu0 0.0
    %530 = vmatprep.subr.mxu0 0.0
    %531 = vmatpush1.msra.mxu0 0.0
    %532 = vmatprep.subr.mxu0 0.0
    %533 = vmatpush1.msra.mxu0 0.0
    %534 = vmatprep.subr.mxu0 0.0
    %535 = vmatpush1.msra.mxu0 0.0
    %536 = vmatprep.subr.mxu0 0.0
    %537 = vmatpush1.msra.mxu0 0.0
    %538 = vmatprep.subr.mxu0 0.0
    %539 = vmatpush1.msra.mxu0 0.0
    %540 = vmatprep.mubr.f32.mxu0 0.0
    %v541 = vand.u32 %v77, 4294901760
    %542 = vmatmul.mubr.f32.gmra.mrb[0].mxu0 %v541
    %v543 = vpop.f32.mrb[0].mxu0
    %v544 = vadd.f32 %v471, %v543
    %v545 = vpop.f32.mrb[0].mxu0
    %546 = vdwg.mxu0
    %v547 = vand.u32 %v86, 4294901760
    %548 = vmatprep.subr.mxu0 %v547
    %v549 = vand.u32 %v84, 4294901760
    %550 = vmatpush1.msra.mxu0 %v549
    %551 = vmatprep.subr.mxu0 0.0
    %552 = vmatpush1.msra.mxu0 0.0
    %553 = vmatprep.subr.mxu0 0.0
    %554 = vmatpush1.msra.mxu0 0.0
    %555 = vmatprep.subr.mxu0 0.0
    %556 = vmatpush1.msra.mxu0 0.0
    %557 = vmatprep.subr.mxu0 0.0
    %558 = vmatpush1.msra.mxu0 0.0
    %559 = vmatprep.subr.mxu0 0.0
    %560 = vmatpush1.msra.mxu0 0.0
    %561 = vmatprep.subr.mxu0 0.0
    %562 = vmatpush1.msra.mxu0 0.0
    %563 = vmatprep.subr.mxu0 0.0
    %564 = vmatpush1.msra.mxu0 0.0
    %565 = vmatprep.subr.mxu0 0.0
    %566 = vmatpush1.msra.mxu0 0.0
    %567 = vmatprep.subr.mxu0 0.0
    %568 = vmatpush1.msra.mxu0 0.0
    %569 = vmatprep.subr.mxu0 0.0
    %570 = vmatpush1.msra.mxu0 0.0
    %571 = vmatprep.subr.mxu0 0.0
    %572 = vmatpush1.msra.mxu0 0.0
    %573 = vmatprep.subr.mxu0 0.0
    %574 = vmatpush1.msra.mxu0 0.0
    %575 = vmatprep.subr.mxu0 0.0
    %576 = vmatpush1.msra.mxu0 0.0
    %577 = vmatprep.subr.mxu0 0.0
    %578 = vmatpush1.msra.mxu0 0.0
    %579 = vmatprep.subr.mxu0 0.0
    %580 = vmatpush1.msra.mxu0 0.0
    %581 = vmatprep.subr.mxu0 0.0
    %582 = vmatpush1.msra.mxu0 0.0
    %583 = vmatprep.subr.mxu0 0.0
    %584 = vmatpush1.msra.mxu0 0.0
    %585 = vmatprep.subr.mxu0 0.0
    %586 = vmatpush1.msra.mxu0 0.0
    %587 = vmatprep.subr.mxu0 0.0
    %588 = vmatpush1.msra.mxu0 0.0
    %589 = vmatprep.subr.mxu0 0.0
    %590 = vmatpush1.msra.mxu0 0.0
    %591 = vmatprep.subr.mxu0 0.0
    %592 = vmatpush1.msra.mxu0 0.0
    %593 = vmatprep.subr.mxu0 0.0
    %594 = vmatpush1.msra.mxu0 0.0
    %595 = vmatprep.subr.mxu0 0.0
    %596 = vmatpush1.msra.mxu0 0.0
    %597 = vmatprep.subr.mxu0 0.0
    %598 = vmatpush1.msra.mxu0 0.0
    %599 = vmatprep.subr.mxu0 0.0
    %600 = vmatpush1.msra.mxu0 0.0
    %601 = vmatprep.subr.mxu0 0.0
    %602 = vmatpush1.msra.mxu0 0.0
    %603 = vmatprep.subr.mxu0 0.0
    %604 = vmatpush1.msra.mxu0 0.0
    %605 = vmatprep.subr.mxu0 0.0
    %606 = vmatpush1.msra.mxu0 0.0
    %607 = vmatprep.subr.mxu0 0.0
    %608 = vmatpush1.msra.mxu0 0.0
    %609 = vmatprep.subr.mxu0 0.0
    %610 = vmatpush1.msra.mxu0 0.0
    %611 = vmatprep.subr.mxu0 0.0
    %612 = vmatpush1.msra.mxu0 0.0
    %613 = vmatprep.mubr.f32.mxu0 0.0
    %v614 = vand.u32 %v77, 4294901760
    %v615 = vsub.f32 %v77, %v614
    %v616 = vand.u32 %v615, 4294901760
    %v617 = vsub.f32 %v615, %v616
    %v618 = vand.u32 %v617, 4294901760
    %619 = vmatmul.mubr.f32.gmra.mrb[0].mxu0 %v618
    %v620 = vpop.f32.mrb[0].mxu0
    %v621 = vadd.f32 %v49, %v620
    %v622 = vpop.f32.mrb[0].mxu0
    %v623 = vadd.f32 %v53, %v622
    %624 = vdwg.mxu0
    %v625 = vand.u32 %v86, 4294901760
    %v626 = vsub.f32 %v86, %v625
    %v627 = vand.u32 %v626, 4294901760
    %v628 = vsub.f32 %v626, %v627
    %v629 = vand.u32 %v628, 4294901760
    %630 = vmatprep.subr.mxu0 %v629
    %v631 = vand.u32 %v84, 4294901760
    %v632 = vsub.f32 %v84, %v631
    %v633 = vand.u32 %v632, 4294901760
    %v634 = vsub.f32 %v632, %v633
    %v635 = vand.u32 %v634, 4294901760
    %636 = vmatpush1.msra.mxu0 %v635
    %637 = vmatprep.subr.mxu0 0.0
    %638 = vmatpush1.msra.mxu0 0.0
    %639 = vmatprep.subr.mxu0 0.0
    %640 = vmatpush1.msra.mxu0 0.0
    %641 = vmatprep.subr.mxu0 0.0
    %642 = vmatpush1.msra.mxu0 0.0
    %643 = vmatprep.subr.mxu0 0.0
    %644 = vmatpush1.msra.mxu0 0.0
    %645 = vmatprep.subr.mxu0 0.0
    %646 = vmatpush1.msra.mxu0 0.0
    %647 = vmatprep.subr.mxu0 0.0
    %648 = vmatpush1.msra.mxu0 0.0
    %649 = vmatprep.subr.mxu0 0.0
    %650 = vmatpush1.msra.mxu0 0.0
    %651 = vmatprep.subr.mxu0 0.0
    %652 = vmatpush1.msra.mxu0 0.0
    %653 = vmatprep.subr.mxu0 0.0
    %654 = vmatpush1.msra.mxu0 0.0
    %655 = vmatprep.subr.mxu0 0.0
    %656 = vmatpush1.msra.mxu0 0.0
    %657 = vmatprep.subr.mxu0 0.0
    %658 = vmatpush1.msra.mxu0 0.0
    %659 = vmatprep.subr.mxu0 0.0
    %660 = vmatpush1.msra.mxu0 0.0
    %661 = vmatprep.subr.mxu0 0.0
    %662 = vmatpush1.msra.mxu0 0.0
    %663 = vmatprep.subr.mxu0 0.0
    %664 = vmatpush1.msra.mxu0 0.0
    %665 = vmatprep.subr.mxu0 0.0
    %666 = vmatpush1.msra.mxu0 0.0
    %667 = vmatprep.subr.mxu0 0.0
    %668 = vmatpush1.msra.mxu0 0.0
    %669 = vmatprep.subr.mxu0 0.0
    %670 = vmatpush1.msra.mxu0 0.0
    %671 = vmatprep.subr.mxu0 0.0
    %672 = vmatpush1.msra.mxu0 0.0
    %673 = vmatprep.subr.mxu0 0.0
    %674 = vmatpush1.msra.mxu0 0.0
    %675 = vmatprep.subr.mxu0 0.0
    %676 = vmatpush1.msra.mxu0 0.0
    %677 = vmatprep.subr.mxu0 0.0
    %678 = vmatpush1.msra.mxu0 0.0
    %679 = vmatprep.subr.mxu0 0.0
    %680 = vmatpush1.msra.mxu0 0.0
    %681 = vmatprep.subr.mxu0 0.0
    %682 = vmatpush1.msra.mxu0 0.0
    %683 = vmatprep.subr.mxu0 0.0
    %684 = vmatpush1.msra.mxu0 0.0
    %685 = vmatprep.subr.mxu0 0.0
    %686 = vmatpush1.msra.mxu0 0.0
    %687 = vmatprep.subr.mxu0 0.0
    %688 = vmatpush1.msra.mxu0 0.0
    %689 = vmatprep.subr.mxu0 0.0
    %690 = vmatpush1.msra.mxu0 0.0
    %691 = vmatprep.subr.mxu0 0.0
    %692 = vmatpush1.msra.mxu0 0.0
    %693 = vmatprep.subr.mxu0 0.0
    %694 = vmatpush1.msra.mxu0 0.0
    %695 = vmatprep.subr.mxu0 0.0
    %696 = vmatpush1.msra.mxu0 0.0
    %697 = vmatprep.subr.mxu0 0.0
    %698 = vmatpush1.msra.mxu0 0.0
    %699 = vmatprep.mubr.f32.mxu0 0.0
    %v700 = vand.u32 %v77, 4294901760
    %701 = vmatmul.mubr.f32.gmra.mrb[0].mxu0 %v700
    %v702 = vpop.f32.mrb[0].mxu0
    %v703 = vadd.f32 %v621, %v702
    %v704 = vpop.f32.mrb[0].mxu0
    %v705 = vadd.f32 %v623, %v704
    %706 = vdwg.mxu0
    %v707 = vand.u32 %v86, 4294901760
    %v708 = vsub.f32 %v86, %v707
    %709 = vmatprep.subr.mxu0 %v708
    %v710 = vand.u32 %v84, 4294901760
    %v711 = vsub.f32 %v84, %v710
    %712 = vmatpush1.msra.mxu0 %v711
    %713 = vmatprep.subr.mxu0 0.0
    %714 = vmatpush1.msra.mxu0 0.0
    %715 = vmatprep.subr.mxu0 0.0
    %716 = vmatpush1.msra.mxu0 0.0
    %717 = vmatprep.subr.mxu0 0.0
    %718 = vmatpush1.msra.mxu0 0.0
    %719 = vmatprep.subr.mxu0 0.0
    %720 = vmatpush1.msra.mxu0 0.0
    %721 = vmatprep.subr.mxu0 0.0
    %722 = vmatpush1.msra.mxu0 0.0
    %723 = vmatprep.subr.mxu0 0.0
    %724 = vmatpush1.msra.mxu0 0.0
    %725 = vmatprep.subr.mxu0 0.0
    %726 = vmatpush1.msra.mxu0 0.0
    %727 = vmatprep.subr.mxu0 0.0
    %728 = vmatpush1.msra.mxu0 0.0
    %729 = vmatprep.subr.mxu0 0.0
    %730 = vmatpush1.msra.mxu0 0.0
    %731 = vmatprep.subr.mxu0 0.0
    %732 = vmatpush1.msra.mxu0 0.0
    %733 = vmatprep.subr.mxu0 0.0
    %734 = vmatpush1.msra.mxu0 0.0
    %735 = vmatprep.subr.mxu0 0.0
    %736 = vmatpush1.msra.mxu0 0.0
    %737 = vmatprep.subr.mxu0 0.0
    %738 = vmatpush1.msra.mxu0 0.0
    %739 = vmatprep.subr.mxu0 0.0
    %740 = vmatpush1.msra.mxu0 0.0
    %741 = vmatprep.subr.mxu0 0.0
    %742 = vmatpush1.msra.mxu0 0.0
    %743 = vmatprep.subr.mxu0 0.0
    %744 = vmatpush1.msra.mxu0 0.0
    %745 = vmatprep.subr.mxu0 0.0
    %746 = vmatpush1.msra.mxu0 0.0
    %747 = vmatprep.subr.mxu0 0.0
    %748 = vmatpush1.msra.mxu0 0.0
    %749 = vmatprep.subr.mxu0 0.0
    %750 = vmatpush1.msra.mxu0 0.0
    %751 = vmatprep.subr.mxu0 0.0
    %752 = vmatpush1.msra.mxu0 0.0
    %753 = vmatprep.subr.mxu0 0.0
    %754 = vmatpush1.msra.mxu0 0.0
    %755 = vmatprep.subr.mxu0 0.0
    %756 = vmatpush1.msra.mxu0 0.0
    %757 = vmatprep.subr.mxu0 0.0
    %758 = vmatpush1.msra.mxu0 0.0
    %759 = vmatprep.subr.mxu0 0.0
    %760 = vmatpush1.msra.mxu0 0.0
    %761 = vmatprep.subr.mxu0 0.0
    %762 = vmatpush1.msra.mxu0 0.0
    %763 = vmatprep.subr.mxu0 0.0
    %764 = vmatpush1.msra.mxu0 0.0
    %765 = vmatprep.subr.mxu0 0.0
    %766 = vmatpush1.msra.mxu0 0.0
    %767 = vmatprep.subr.mxu0 0.0
    %768 = vmatpush1.msra.mxu0 0.0
    %769 = vmatprep.subr.mxu0 0.0
    %770 = vmatpush1.msra.mxu0 0.0
    %771 = vmatprep.subr.mxu0 0.0
    %772 = vmatpush1.msra.mxu0 0.0
    %773 = vmatprep.subr.mxu0 0.0
    %774 = vmatpush1.msra.mxu0 0.0
    %775 = vmatprep.mubr.f32.mxu0 0.0
    %v776 = vand.u32 %v77, 4294901760
    %v777 = vsub.f32 %v77, %v776
    %778 = vmatmul.mubr.f32.gmra.mrb[0].mxu0 %v777
    %v779 = vpop.f32.mrb[0].mxu0
    %v780 = vadd.f32 %v703, %v779
    %v781 = vpop.f32.mrb[0].mxu0
    %v782 = vadd.f32 %v705, %v781
    %783 = vdwg.mxu0
    %v784 = vand.u32 %v86, 4294901760
    %785 = vmatprep.subr.mxu0 %v784
    %v786 = vand.u32 %v84, 4294901760
    %787 = vmatpush1.msra.mxu0 %v786
    %788 = vmatprep.subr.mxu0 0.0
    %789 = vmatpush1.msra.mxu0 0.0
    %790 = vmatprep.subr.mxu0 0.0
    %791 = vmatpush1.msra.mxu0 0.0
    %792 = vmatprep.subr.mxu0 0.0
    %793 = vmatpush1.msra.mxu0 0.0
    %794 = vmatprep.subr.mxu0 0.0
    %795 = vmatpush1.msra.mxu0 0.0
    %796 = vmatprep.subr.mxu0 0.0
    %797 = vmatpush1.msra.mxu0 0.0
    %798 = vmatprep.subr.mxu0 0.0
    %799 = vmatpush1.msra.mxu0 0.0
    %800 = vmatprep.subr.mxu0 0.0
    %801 = vmatpush1.msra.mxu0 0.0
    %802 = vmatprep.subr.mxu0 0.0
    %803 = vmatpush1.msra.mxu0 0.0
    %804 = vmatprep.subr.mxu0 0.0
    %805 = vmatpush1.msra.mxu0 0.0
    %806 = vmatprep.subr.mxu0 0.0
    %807 = vmatpush1.msra.mxu0 0.0
    %808 = vmatprep.subr.mxu0 0.0
    %809 = vmatpush1.msra.mxu0 0.0
    %810 = vmatprep.subr.mxu0 0.0
    %811 = vmatpush1.msra.mxu0 0.0
    %812 = vmatprep.subr.mxu0 0.0
    %813 = vmatpush1.msra.mxu0 0.0
    %814 = vmatprep.subr.mxu0 0.0
    %815 = vmatpush1.msra.mxu0 0.0
    %816 = vmatprep.subr.mxu0 0.0
    %817 = vmatpush1.msra.mxu0 0.0
    %818 = vmatprep.subr.mxu0 0.0
    %819 = vmatpush1.msra.mxu0 0.0
    %820 = vmatprep.subr.mxu0 0.0
    %821 = vmatpush1.msra.mxu0 0.0
    %822 = vmatprep.subr.mxu0 0.0
    %823 = vmatpush1.msra.mxu0 0.0
    %824 = vmatprep.subr.mxu0 0.0
    %825 = vmatpush1.msra.mxu0 0.0
    %826 = vmatprep.subr.mxu0 0.0
    %827 = vmatpush1.msra.mxu0 0.0
    %828 = vmatprep.subr.mxu0 0.0
    %829 = vmatpush1.msra.mxu0 0.0
    %830 = vmatprep.subr.mxu0 0.0
    %831 = vmatpush1.msra.mxu0 0.0
    %832 = vmatprep.subr.mxu0 0.0
    %833 = vmatpush1.msra.mxu0 0.0
    %834 = vmatprep.subr.mxu0 0.0
    %835 = vmatpush1.msra.mxu0 0.0
    %836 = vmatprep.subr.mxu0 0.0
    %837 = vmatpush1.msra.mxu0 0.0
    %838 = vmatprep.subr.mxu0 0.0
    %839 = vmatpush1.msra.mxu0 0.0
    %840 = vmatprep.subr.mxu0 0.0
    %841 = vmatpush1.msra.mxu0 0.0
    %842 = vmatprep.subr.mxu0 0.0
    %843 = vmatpush1.msra.mxu0 0.0
    %844 = vmatprep.subr.mxu0 0.0
    %845 = vmatpush1.msra.mxu0 0.0
    %846 = vmatprep.subr.mxu0 0.0
    %847 = vmatpush1.msra.mxu0 0.0
    %848 = vmatprep.subr.mxu0 0.0
    %849 = vmatpush1.msra.mxu0 0.0
    %850 = vmatprep.mubr.f32.mxu0 0.0
    %v851 = vand.u32 %v77, 4294901760
    %v852 = vsub.f32 %v77, %v851
    %v853 = vand.u32 %v852, 4294901760
    %854 = vmatmul.mubr.f32.gmra.mrb[0].mxu0 %v853
    %v855 = vpop.f32.mrb[0].mxu0
    %v856 = vadd.f32 %v780, %v855
    %v857 = vpop.f32.mrb[0].mxu0
    %v858 = vadd.f32 %v782, %v857
    %859 = vdwg.mxu0
    %v860 = vand.u32 %v86, 4294901760
    %v861 = vsub.f32 %v86, %v860
    %v862 = vand.u32 %v861, 4294901760
    %863 = vmatprep.subr.mxu0 %v862
    %v864 = vand.u32 %v84, 4294901760
    %v865 = vsub.f32 %v84, %v864
    %v866 = vand.u32 %v865, 4294901760
    %867 = vmatpush1.msra.mxu0 %v866
    %868 = vmatprep.subr.mxu0 0.0
    %869 = vmatpush1.msra.mxu0 0.0
    %870 = vmatprep.subr.mxu0 0.0
    %871 = vmatpush1.msra.mxu0 0.0
    %872 = vmatprep.subr.mxu0 0.0
    %873 = vmatpush1.msra.mxu0 0.0
    %874 = vmatprep.subr.mxu0 0.0
    %875 = vmatpush1.msra.mxu0 0.0
    %876 = vmatprep.subr.mxu0 0.0
    %877 = vmatpush1.msra.mxu0 0.0
    %878 = vmatprep.subr.mxu0 0.0
    %879 = vmatpush1.msra.mxu0 0.0
    %880 = vmatprep.subr.mxu0 0.0
    %881 = vmatpush1.msra.mxu0 0.0
    %882 = vmatprep.subr.mxu0 0.0
    %883 = vmatpush1.msra.mxu0 0.0
    %884 = vmatprep.subr.mxu0 0.0
    %885 = vmatpush1.msra.mxu0 0.0
    %886 = vmatprep.subr.mxu0 0.0
    %887 = vmatpush1.msra.mxu0 0.0
    %888 = vmatprep.subr.mxu0 0.0
    %889 = vmatpush1.msra.mxu0 0.0
    %890 = vmatprep.subr.mxu0 0.0
    %891 = vmatpush1.msra.mxu0 0.0
    %892 = vmatprep.subr.mxu0 0.0
    %893 = vmatpush1.msra.mxu0 0.0
    %894 = vmatprep.subr.mxu0 0.0
    %895 = vmatpush1.msra.mxu0 0.0
    %896 = vmatprep.subr.mxu0 0.0
    %897 = vmatpush1.msra.mxu0 0.0
    %898 = vmatprep.subr.mxu0 0.0
    %899 = vmatpush1.msra.mxu0 0.0
    %900 = vmatprep.subr.mxu0 0.0
    %901 = vmatpush1.msra.mxu0 0.0
    %902 = vmatprep.subr.mxu0 0.0
    %903 = vmatpush1.msra.mxu0 0.0
    %904 = vmatprep.subr.mxu0 0.0
    %905 = vmatpush1.msra.mxu0 0.0
    %906 = vmatprep.subr.mxu0 0.0
    %907 = vmatpush1.msra.mxu0 0.0
    %908 = vmatprep.subr.mxu0 0.0
    %909 = vmatpush1.msra.mxu0 0.0
    %910 = vmatprep.subr.mxu0 0.0
    %911 = vmatpush1.msra.mxu0 0.0
    %912 = vmatprep.subr.mxu0 0.0
    %913 = vmatpush1.msra.mxu0 0.0
    %914 = vmatprep.subr.mxu0 0.0
    %915 = vmatpush1.msra.mxu0 0.0
    %916 = vmatprep.subr.mxu0 0.0
    %917 = vmatpush1.msra.mxu0 0.0
    %918 = vmatprep.subr.mxu0 0.0
    %919 = vmatpush1.msra.mxu0 0.0
    %920 = vmatprep.subr.mxu0 0.0
    %921 = vmatpush1.msra.mxu0 0.0
    %922 = vmatprep.subr.mxu0 0.0
    %923 = vmatpush1.msra.mxu0 0.0
    %924 = vmatprep.subr.mxu0 0.0
    %925 = vmatpush1.msra.mxu0 0.0
    %926 = vmatprep.subr.mxu0 0.0
    %927 = vmatpush1.msra.mxu0 0.0
    %928 = vmatprep.subr.mxu0 0.0
    %929 = vmatpush1.msra.mxu0 0.0
    %930 = vmatprep.mubr.f32.mxu0 0.0
    %v931 = vand.u32 %v77, 4294901760
    %932 = vmatmul.mubr.f32.gmra.mrb[0].mxu0 %v931
    %v933 = vpop.f32.mrb[0].mxu0
    %v934 = vadd.f32 %v856, %v933
    %v935 = vpop.f32.mrb[0].mxu0
    %v936 = vadd.f32 %v858, %v935
    %937 = vdwg.mxu0
    %v938 = vand.u32 %v86, 4294901760
    %939 = vmatprep.subr.mxu0 %v938
    %v940 = vand.u32 %v84, 4294901760
    %941 = vmatpush1.msra.mxu0 %v940
    %942 = vmatprep.subr.mxu0 0.0
    %943 = vmatpush1.msra.mxu0 0.0
    %944 = vmatprep.subr.mxu0 0.0
    %945 = vmatpush1.msra.mxu0 0.0
    %946 = vmatprep.subr.mxu0 0.0
    %947 = vmatpush1.msra.mxu0 0.0
    %948 = vmatprep.subr.mxu0 0.0
    %949 = vmatpush1.msra.mxu0 0.0
    %950 = vmatprep.subr.mxu0 0.0
    %951 = vmatpush1.msra.mxu0 0.0
    %952 = vmatprep.subr.mxu0 0.0
    %953 = vmatpush1.msra.mxu0 0.0
    %954 = vmatprep.subr.mxu0 0.0
    %955 = vmatpush1.msra.mxu0 0.0
    %956 = vmatprep.subr.mxu0 0.0
    %957 = vmatpush1.msra.mxu0 0.0
    %958 = vmatprep.subr.mxu0 0.0
    %959 = vmatpush1.msra.mxu0 0.0
    %960 = vmatprep.subr.mxu0 0.0
    %961 = vmatpush1.msra.mxu0 0.0
    %962 = vmatprep.subr.mxu0 0.0
    %963 = vmatpush1.msra.mxu0 0.0
    %964 = vmatprep.subr.mxu0 0.0
    %965 = vmatpush1.msra.mxu0 0.0
    %966 = vmatprep.subr.mxu0 0.0
    %967 = vmatpush1.msra.mxu0 0.0
    %968 = vmatprep.subr.mxu0 0.0
    %969 = vmatpush1.msra.mxu0 0.0
    %970 = vmatprep.subr.mxu0 0.0
    %971 = vmatpush1.msra.mxu0 0.0
    %972 = vmatprep.subr.mxu0 0.0
    %973 = vmatpush1.msra.mxu0 0.0
    %974 = vmatprep.subr.mxu0 0.0
    %975 = vmatpush1.msra.mxu0 0.0
    %976 = vmatprep.subr.mxu0 0.0
    %977 = vmatpush1.msra.mxu0 0.0
    %978 = vmatprep.subr.mxu0 0.0
    %979 = vmatpush1.msra.mxu0 0.0
    %980 = vmatprep.subr.mxu0 0.0
    %981 = vmatpush1.msra.mxu0 0.0
    %982 = vmatprep.subr.mxu0 0.0
    %983 = vmatpush1.msra.mxu0 0.0
    %984 = vmatprep.subr.mxu0 0.0
    %985 = vmatpush1.msra.mxu0 0.0
    %986 = vmatprep.subr.mxu0 0.0
    %987 = vmatpush1.msra.mxu0 0.0
    %988 = vmatprep.subr.mxu0 0.0
    %989 = vmatpush1.msra.mxu0 0.0
    %990 = vmatprep.subr.mxu0 0.0
    %991 = vmatpush1.msra.mxu0 0.0
    %992 = vmatprep.subr.mxu0 0.0
    %993 = vmatpush1.msra.mxu0 0.0
    %994 = vmatprep.subr.mxu0 0.0
    %995 = vmatpush1.msra.mxu0 0.0
    %996 = vmatprep.subr.mxu0 0.0
    %997 = vmatpush1.msra.mxu0 0.0
    %998 = vmatprep.subr.mxu0 0.0
    %999 = vmatpush1.msra.mxu0 0.0
    %1000 = vmatprep.subr.mxu0 0.0
    %1001 = vmatpush1.msra.mxu0 0.0
    %1002 = vmatprep.subr.mxu0 0.0
    %1003 = vmatpush1.msra.mxu0 0.0
    %1004 = vmatprep.mubr.f32.mxu0 0.0
    %v1005 = vand.u32 %v77, 4294901760
    %1006 = vmatmul.mubr.f32.gmra.mrb[0].mxu0 %v1005
    %v1007 = vpop.f32.mrb[0].mxu0
    %v1008 = vadd.f32 %v934, %v1007
    %v1009 = vpop.f32.mrb[0].mxu0
    %v1010 = vadd.f32 %v936, %v1009
    %1011 = vdwg.mxu0
    %v1012 = vxor.u32 %v544, 2147483648
    %v1013 = vmul.f32 %v1012, 1.442695
    %v1014 = vpow.pop %v1013
    %v1015 = vadd.f32 %v1014, 1.0
    %v1016 = vrcp.pop %v1015
    %v1017 = vmul.f32 1.0, %v1016
    %v1018 = vtanh.pop %v1008
    %v1019 = vxor.u32 %v1010, 2147483648
    %v1020 = vmul.f32 %v1019, 1.442695
    %v1021 = vpow.pop %v1020
    %v1022 = vadd.f32 %v1021, 1.0
    %v1023 = vrcp.pop %v1022
    %v1024 = vmul.f32 1.0, %v1023
    %v1025 = vmul.f32 %v1017, %v1018
    %v1026 = vtanh.pop %v1025
    %v1027 = vmul.f32 %v1024, %v1026
    %1028 = vst [vmem:[%s3] sm:$0x3] %v1027
    %1029 = vst [vmem:[%s3 + $0x2] sm:$0x3] %v1025
    // Predicated region
    $region22: #{lstm_cell_forward.1} parent=1 // pred_check
      _
    $region23: #{lstm_cell_forward.1} parent=1 // pred_check_branch
      %1031 = sbr.rel (0) target = $region25
    $region24: #{lstm_cell_forward.1} parent=1 // pred_region
      _
    $region25: #{lstm_cell_forward.1} parent=1 // pred_fallthru
      _
    // Predicated region
    $region26: #{lstm_cell_forward.1} parent=1 // pred_check
      _
    $region27: #{lstm_cell_forward.1} parent=1 // pred_check_branch
      %1033 = sbr.rel (0) target = $region29
    $region28: #{lstm_cell_forward.1} parent=1 // pred_region
      _
    $region29: #{lstm_cell_forward.1} parent=1 // pred_fallthru
      _
    %1034 = vsyncpa [#allocation3], 1
    %1035 = vsyncpa [#allocation5], 1

</llo_original>
